<compile_context>
chip_gen: v6e
topology: v6e:2x2x1
jax: 0.10.0
libtpu: 0.0.40
codegen_flags: <defaults>
</compile_context>

<pallas_src>
import jax
import jax.numpy as jnp
from jax.experimental import pallas as pl
from jax.experimental.pallas import tpu as pltpu


def policy_nn_kernel(x_ref, w1_ref, b1_ref, w2_ref, b2_ref, out_ref):
    # x: [TB, 6], w1: [6, 32], b1: [1, 32], w2: [32, 3], b2: [1, 3], out: [TB, 3]
    x = x_ref[...]

    # FC1 + ReLU
    h = jnp.dot(x, w1_ref[...], preferred_element_type=jnp.float32) + b1_ref[...]
    h = jnp.maximum(h, 0.0)

    # FC2 (narrow 3-lane logits; Mosaic masks the padded lanes internally)
    logits = jnp.dot(h, w2_ref[...], preferred_element_type=jnp.float32) + b2_ref[...]

    # Numerically-stable softmax over the 3 real logit lanes.
    m = jnp.max(logits, axis=-1, keepdims=True)
    e = jnp.exp(logits - m)
    denom = jnp.sum(e, axis=-1, keepdims=True)
    # Exact divide so rows sum to 1 to f32 rounding (fixes the prior assert;
    # this kernel is HBM-bound so the extra VALU work is free).
    out_ref[...] = (e / denom).astype(out_ref.dtype)


def prepare_params(w1, b1, w2, b2):
    """One-time layout prep (kept OFF the per-forward hot path).

    PyTorch layout in:  w1 [h1, in], b1 [h1], w2 [out, h1], b2 [out].
    Returns pre-transposed f32 tensors at their natural (un-padded) sizes:
      w1p [in, h1], b1p [1, h1], w2p [h1, out], b2p [1, out]
    """
    w1p = jnp.asarray(w1, jnp.float32).T
    b1p = jnp.asarray(b1, jnp.float32).reshape(1, -1)
    w2p = jnp.asarray(w2, jnp.float32).T
    b2p = jnp.asarray(b2, jnp.float32).reshape(1, -1)
    return w1p, b1p, w2p, b2p


def policy_nn_forward(x, params, *, tb=2048):
    """x: [B, in] f32; params = (w1p, b1p, w2p, b2p) from prepare_params()."""
    w1p, b1p, w2p, b2p = params
    B, F = x.shape
    OUT = w2p.shape[1]

    # Full-array block for small B; otherwise a 2048-row tile (multiple of 8).
    # Ragged last block is handled by Pallas (out-of-range rows masked on
    # writeback; any NaN/Inf computed on dead input rows never reaches HBM).
    TB = B if B <= tb else tb
    grid = (pl.cdiv(B, TB),)

    return pl.pallas_call(
        policy_nn_kernel,
        out_shape=jax.ShapeDtypeStruct((B, OUT), jnp.float32),
        grid=grid,
        in_specs=[
            pl.BlockSpec((TB, F), lambda i: (i, 0)),       # batch-tiled activations
            pl.BlockSpec(w1p.shape, lambda i: (0, 0)),     # resident (replicated) weights
            pl.BlockSpec(b1p.shape, lambda i: (0, 0)),
            pl.BlockSpec(w2p.shape, lambda i: (0, 0)),
            pl.BlockSpec(b2p.shape, lambda i: (0, 0)),
        ],
        # Narrow output: last block dim == full array dim (3) -> legal; cuts
        # output HBM traffic ~42x vs the old padded 128-lane slab + slice.
        out_specs=pl.BlockSpec((TB, OUT), lambda i: (i, 0)),
        compiler_params=pltpu.CompilerParams(
            dimension_semantics=("parallel",)),
    )(x, w1p, b1p, w2p, b2p)


def init_params(key, inpt_size=6, outpt_size=3, h_size1=32):
    """Deterministic init mimicking nn.Linear's uniform(-1/sqrt(fan_in), 1/sqrt(fan_in))."""
    k1, k2, k3, k4 = jax.random.split(key, 4)
    bound1 = 1.0 / jnp.sqrt(inpt_size)
    bound2 = 1.0 / jnp.sqrt(h_size1)
    w1 = jax.random.uniform(k1, (h_size1, inpt_size), jnp.float32, -bound1, bound1)
    b1 = jax.random.uniform(k2, (h_size1,), jnp.float32, -bound1, bound1)
    w2 = jax.random.uniform(k3, (outpt_size, h_size1), jnp.float32, -bound2, bound2)
    b2 = jax.random.uniform(k4, (outpt_size,), jnp.float32, -bound2, bound2)
    return w1, b1, w2, b2


if __name__ == "__main__":
    key = jax.random.PRNGKey(0)
    k_params, k_x = jax.random.split(key)

    inpt_size, outpt_size, h_size1 = 6, 3, 32
    batch = 8

    w1, b1, w2, b2 = init_params(k_params, inpt_size, outpt_size, h_size1)
    x = jax.random.normal(k_x, (batch, inpt_size), jnp.float32)

    # One-time parameter layout prep (not repeated per forward call).
    params = prepare_params(w1, b1, w2, b2)
    fwd = jax.jit(policy_nn_forward)

    probs = fwd(x, params)
    probs = jax.block_until_ready(probs)

    # Sanity check against pure-JAX reference.
    ref = jax.nn.softmax(
        jnp.maximum(x @ w1.T + b1, 0.0) @ w2.T + b2, axis=1
    )
    assert probs.shape == (batch, outpt_size)
    # Tolerance covers MXU f32-via-bf16-pass matmul differences on real HW.
    assert jnp.allclose(probs, ref, atol=2e-3, rtol=2e-3)
    # Exact softmax divide -> rows sum to 1 to f32 rounding.
    assert jnp.allclose(jnp.sum(probs, axis=1), 1.0, atol=1e-3)

    print("KERNEL_OK")
</pallas_src>

<mosaic_0001>
module attributes {stable_mosaic.version = 11 : i64} {
  func.func @policy_nn_kernel(%arg0: i32, %arg1: memref<8x6xf32, #tpu.memory_space<vmem>>, %arg2: memref<6x32xf32, #tpu.memory_space<vmem>>, %arg3: memref<1x32xf32, #tpu.memory_space<vmem>>, %arg4: memref<32x3xf32, #tpu.memory_space<vmem>>, %arg5: memref<1x3xf32, #tpu.memory_space<vmem>>, %arg6: memref<8x3xf32, #tpu.memory_space<vmem>>) attributes {dimension_semantics = [#tpu.dimension_semantics<parallel>], iteration_bounds = array<i64: 1>, scalar_prefetch = 0 : i64, scratch_operands = 0 : i64, tpu.core_type = #tpu.core_type<tc>, window_params = [{transform_indices = @transform_0, window_bounds = array<i64: 8, 6>}, {pipeline_mode = #tpu.pipeline_mode<synchronous>, transform_indices = @transform_1, window_bounds = array<i64: 6, 32>}, {pipeline_mode = #tpu.pipeline_mode<synchronous>, transform_indices = @transform_2, window_bounds = array<i64: 1, 32>}, {pipeline_mode = #tpu.pipeline_mode<synchronous>, transform_indices = @transform_3, window_bounds = array<i64: 32, 3>}, {pipeline_mode = #tpu.pipeline_mode<synchronous>, transform_indices = @transform_4, window_bounds = array<i64: 1, 3>}, {transform_indices = @transform_5, window_bounds = array<i64: 8, 3>}]} {
    %c0 = arith.constant 0 : index
    %c0_0 = arith.constant 0 : index
    %0 = vector.load %arg1[%c0, %c0_0] : memref<8x6xf32, #tpu.memory_space<vmem>>, vector<8x6xf32>
    %c0_1 = arith.constant 0 : index
    %c0_2 = arith.constant 0 : index
    %1 = vector.load %arg2[%c0_1, %c0_2] : memref<6x32xf32, #tpu.memory_space<vmem>>, vector<6x32xf32>
    %cst = arith.constant dense<0.000000e+00> : vector<8x32xf32>
    %2 = tpu.matmul %0, %1, %cst {dimension_numbers = #tpu.dot_dimension_numbers<[1], [0], [0], [1], [0, 0, 1, 1], [], []>} : vector<8x6xf32>, vector<6x32xf32>, vector<8x32xf32> -> vector<8x32xf32>
    %c0_3 = arith.constant 0 : index
    %c0_4 = arith.constant 0 : index
    %3 = vector.load %arg3[%c0_3, %c0_4] : memref<1x32xf32, #tpu.memory_space<vmem>>, vector<1x32xf32>
    %4 = vector.broadcast %3 : vector<1x32xf32> to vector<8x32xf32>
    %5 = arith.addf %2, %4 : vector<8x32xf32>
    %cst_5 = arith.constant 0.000000e+00 : f32
    %6 = vector.broadcast %cst_5 : f32 to vector<8x32xf32>
    %7 = arith.maximumf %5, %6 : vector<8x32xf32>
    %c0_6 = arith.constant 0 : index
    %c0_7 = arith.constant 0 : index
    %8 = vector.load %arg4[%c0_6, %c0_7] : memref<32x3xf32, #tpu.memory_space<vmem>>, vector<32x3xf32>
    %cst_8 = arith.constant dense<0.000000e+00> : vector<8x3xf32>
    %9 = tpu.matmul %7, %8, %cst_8 {dimension_numbers = #tpu.dot_dimension_numbers<[1], [0], [0], [1], [0, 0, 1, 1], [], []>} : vector<8x32xf32>, vector<32x3xf32>, vector<8x3xf32> -> vector<8x3xf32>
    %c0_9 = arith.constant 0 : index
    %c0_10 = arith.constant 0 : index
    %10 = vector.load %arg5[%c0_9, %c0_10] : memref<1x3xf32, #tpu.memory_space<vmem>>, vector<1x3xf32>
    %11 = vector.broadcast %10 : vector<1x3xf32> to vector<8x3xf32>
    %12 = arith.addf %9, %11 : vector<8x3xf32>
    %cst_11 = arith.constant dense<0xFF800000> : vector<8xf32>
    %13 = vector.multi_reduction <maximumf>, %12, %cst_11 [1] : vector<8x3xf32> to vector<8xf32>
    %14 = vector.shape_cast %13 : vector<8xf32> to vector<8x1xf32>
    %15 = vector.broadcast %14 : vector<8x1xf32> to vector<8x3xf32>
    %16 = arith.subf %12, %15 : vector<8x3xf32>
    %17 = math.exp %16 : vector<8x3xf32>
    %cst_12 = arith.constant dense<0.000000e+00> : vector<8xf32>
    %18 = vector.multi_reduction <add>, %17, %cst_12 [1] : vector<8x3xf32> to vector<8xf32>
    %19 = vector.shape_cast %18 : vector<8xf32> to vector<8x1xf32>
    %20 = vector.broadcast %19 : vector<8x1xf32> to vector<8x3xf32>
    %21 = arith.divf %17, %20 : vector<8x3xf32>
    %c0_13 = arith.constant 0 : index
    %c0_14 = arith.constant 0 : index
    %22 = vector.load %arg6[%c0_13, %c0_14] : memref<8x3xf32, #tpu.memory_space<vmem>>, vector<8x3xf32>
    tpu.vector_store %arg6[%c0_13, %c0_14], %21 {strides = array<i32>} : memref<8x3xf32, #tpu.memory_space<vmem>>, vector<8x3xf32>,
    return
  }
  func.func @transform_0(%arg0: i32) -> (i32, i32) {
    %c0_i32 = arith.constant 0 : i32
    %c0_i32_0 = arith.constant 0 : i32
    return %arg0, %c0_i32 : i32, i32
  }
  func.func @transform_1(%arg0: i32) -> (i32, i32) {
    %c0_i32 = arith.constant 0 : i32
    %c0_i32_0 = arith.constant 0 : i32
    %c0_i32_1 = arith.constant 0 : i32
    return %c0_i32, %c0_i32_0 : i32, i32
  }
  func.func @transform_2(%arg0: i32) -> (i32, i32) {
    %c0_i32 = arith.constant 0 : i32
    %c0_i32_0 = arith.constant 0 : i32
    %c0_i32_1 = arith.constant 0 : i32
    return %c0_i32, %c0_i32_0 : i32, i32
  }
  func.func @transform_3(%arg0: i32) -> (i32, i32) {
    %c0_i32 = arith.constant 0 : i32
    %c0_i32_0 = arith.constant 0 : i32
    %c0_i32_1 = arith.constant 0 : i32
    return %c0_i32, %c0_i32_0 : i32, i32
  }
  func.func @transform_4(%arg0: i32) -> (i32, i32) {
    %c0_i32 = arith.constant 0 : i32
    %c0_i32_0 = arith.constant 0 : i32
    %c0_i32_1 = arith.constant 0 : i32
    return %c0_i32, %c0_i32_0 : i32, i32
  }
  func.func @transform_5(%arg0: i32) -> (i32, i32) {
    %c0_i32 = arith.constant 0 : i32
    %c0_i32_0 = arith.constant 0 : i32
    return %arg0, %c0_i32 : i32, i32
  }
}

</mosaic_0001>

<llo_original>
// kernel: policy_nn_forward.1
$region0: #{policy_nn_forward.1}
  #allocation0 [shape = 'u32[]', space=smem, size = 0x4, offset = 0x4, fixed_abs, tag = 'smem constant byte address 0x4 - core index']
  #allocation1 [shape = 'u32[144,128]{1,0:T(1,128)}', space=vmem, size = 0x12000, scoped, tag = 'internal scratch']
  %s0 = inlined_call_operand.vmem [shape: f32[8,6], index: 0, kind: input, shape index: {}]
  %s1 = inlined_call_operand.vmem [shape: f32[6,32], index: 1, kind: input, shape index: {}]
  %s2 = inlined_call_operand.vmem [shape: f32[1,32], index: 2, kind: input, shape index: {}]
  %s3 = inlined_call_operand.vmem [shape: f32[32,3], index: 3, kind: input, shape index: {}]
  %s4 = inlined_call_operand.vmem [shape: f32[1,3], index: 4, kind: input, shape index: {}]
  %s5 = inlined_call_operand.vmem [shape: f32[8,3], index: 5, kind: output, shape index: {}]
  %s6 = sld [smem:[#allocation0]]
  $region30: #{policy_nn_forward.1} parent=0
    _
  %s8 = ssub.s32 1, %s6
  %s9 = scalar_select 0, %s8, %s6
  // Predicated region
  $region2: #{policy_nn_forward.1} parent=0 // pred_check
    _
  $region3: #{policy_nn_forward.1} parent=0 // pred_check_branch
    %11 = sbr.rel (0) target = $region5
  $region4: #{policy_nn_forward.1} parent=0 // pred_region
    _
  $region5: #{policy_nn_forward.1} parent=0 // pred_fallthru
    _
  // Predicated region
  $region6: #{policy_nn_forward.1} parent=0 // pred_check
    _
  $region7: #{policy_nn_forward.1} parent=0 // pred_check_branch
    %13 = sbr.rel (0) target = $region9
  $region8: #{policy_nn_forward.1} parent=0 // pred_region
    _
  $region9: #{policy_nn_forward.1} parent=0 // pred_fallthru
    _
  // Predicated region
  $region10: #{policy_nn_forward.1} parent=0 // pred_check
    _
  $region11: #{policy_nn_forward.1} parent=0 // pred_check_branch
    %15 = sbr.rel (0) target = $region13
  $region12: #{policy_nn_forward.1} parent=0 // pred_region
    _
  $region13: #{policy_nn_forward.1} parent=0 // pred_fallthru
    _
  // Predicated region
  $region14: #{policy_nn_forward.1} parent=0 // pred_check
    _
  $region15: #{policy_nn_forward.1} parent=0 // pred_check_branch
    %17 = sbr.rel (0) target = $region17
  $region16: #{policy_nn_forward.1} parent=0 // pred_region
    _
  $region17: #{policy_nn_forward.1} parent=0 // pred_fallthru
    _
  // Predicated region
  $region18: #{policy_nn_forward.1} parent=0 // pred_check
    _
  $region19: #{policy_nn_forward.1} parent=0 // pred_check_branch
    %19 = sbr.rel (0) target = $region21
  $region20: #{policy_nn_forward.1} parent=0 // pred_region
    _
  $region21: #{policy_nn_forward.1} parent=0 // pred_fallthru
    _
  %v20 = vld [vmem:[%s0] sm:$0xff]
  %v21 = vld [vmem:[%s1] sm:$0x3f]
  %v22 = vld [vmem:[%s2] sm:$0x1]
  %v24 = vlaneseq
  %v25 = vshrl.u32 %v24, 7
  %v26 = vsub.s32 0, %v25
  %v27 = vrot.slane %v22, %v26
  %vm29 = vcmask 48128
  %v31 = vsel %vm29, %v20, 0
  %vm33 = vcmask 1045504
  %v35 = vsel %vm33, %v21, 0
  %37 = vmatprep.subr.mxu0 0.0
  %38 = vmatpush1.msra.mxu0 0.0
  %39 = vmatprep.subr.mxu0 0.0
  %40 = vmatpush1.msra.mxu0 0.0
  %41 = vmatprep.subr.mxu0 0.0
  %42 = vmatpush1.msra.mxu0 0.0
  %43 = vmatprep.subr.mxu0 0.0
  %44 = vmatpush1.msra.mxu0 0.0
  %45 = vmatprep.subr.mxu0 0.0
  %46 = vmatpush1.msra.mxu0 0.0
  %47 = vmatprep.subr.mxu0 0.0
  %48 = vmatpush1.msra.mxu0 0.0
  %49 = vmatprep.subr.mxu0 0.0
  %50 = vmatpush1.msra.mxu0 0.0
  %51 = vmatprep.subr.mxu0 0.0
  %52 = vmatpush1.msra.mxu0 0.0
  %53 = vmatprep.subr.mxu0 0.0
  %54 = vmatpush1.msra.mxu0 0.0
  %55 = vmatprep.subr.mxu0 0.0
  %56 = vmatpush1.msra.mxu0 0.0
  %57 = vmatprep.subr.mxu0 0.0
  %58 = vmatpush1.msra.mxu0 0.0
  %59 = vmatprep.subr.mxu0 0.0
  %60 = vmatpush1.msra.mxu0 0.0
  %61 = vmatprep.subr.mxu0 0.0
  %62 = vmatpush1.msra.mxu0 0.0
  %63 = vmatprep.subr.mxu0 0.0
  %64 = vmatpush1.msra.mxu0 0.0
  %65 = vmatprep.subr.mxu0 0.0
  %66 = vmatpush1.msra.mxu0 0.0
  %67 = vmatprep.subr.mxu0 0.0
  %68 = vmatpush1.msra.mxu0 %v35
  %69 = vmatprep.subr.mxu0 0.0
  %70 = vmatpush2.msra.mxu0 0.0
  %71 = vmatprep.subr.mxu0 0.0
  %72 = vmatpush2.msra.mxu0 0.0
  %73 = vmatprep.subr.mxu0 0.0
  %74 = vmatpush2.msra.mxu0 0.0
  %75 = vmatprep.subr.mxu0 0.0
  %76 = vmatpush2.msra.mxu0 0.0
  %77 = vmatprep.subr.mxu0 0.0
  %78 = vmatpush2.msra.mxu0 0.0
  %79 = vmatprep.subr.mxu0 0.0
  %80 = vmatpush2.msra.mxu0 0.0
  %81 = vmatprep.subr.mxu0 0.0
  %82 = vmatpush2.msra.mxu0 0.0
  %83 = vmatprep.subr.mxu0 0.0
  %84 = vmatpush2.msra.mxu0 0.0
  %85 = vmatprep.subr.mxu0 0.0
  %86 = vmatpush2.msra.mxu0 0.0
  %87 = vmatprep.subr.mxu0 0.0
  %88 = vmatpush2.msra.mxu0 0.0
  %89 = vmatprep.subr.mxu0 0.0
  %90 = vmatpush2.msra.mxu0 0.0
  %91 = vmatprep.subr.mxu0 0.0
  %92 = vmatpush2.msra.mxu0 0.0
  %93 = vmatprep.subr.mxu0 0.0
  %94 = vmatpush2.msra.mxu0 0.0
  %95 = vmatprep.subr.mxu0 0.0
  %96 = vmatpush2.msra.mxu0 0.0
  %97 = vmatprep.subr.mxu0 0.0
  %98 = vmatpush2.msra.mxu0 0.0
  %99 = vmatprep.subr.mxu0 0.0
  %100 = vmatpush2.msra.mxu0 0.0
  %101 = vmatprep.mubr.f32.mxu0 0.0
  %102 = vmatmul.mubr.f32.gmra.mxu0 %v31
  %v103 = vpop.f32.mrf.mxu0
  %v104 = vadd.f32 %v27, %v103
  %v105 = vpop.f32.mrf.mxu0
  %106 = vdwg.mxu0
  %v107 = vmax.f32 %v104, 0.0
  %v108 = vld [vmem:[%s3] sm:$0xff]
  %v109 = vld [vmem:[%s3 + $0x8] sm:$0xff]
  %v110 = vld [vmem:[%s3 + $0x10] sm:$0xff]
  %v111 = vld [vmem:[%s3 + $0x18] sm:$0xff]
  %v112 = vld [vmem:[%s4] sm:$0x1]
  %v114 = vlaneseq
  %v115 = vshrl.u32 %v114, 7
  %v116 = vsub.s32 0, %v115
  %v117 = vrot.slane %v112, %v116
  %vm119 = vcmask 261120
  %v121 = vsel %vm119, %v107, 0
  %123 = vmatprep.subr.mxu0 0.0
  %124 = vmatpush1.msra.mxu0 0.0
  %125 = vmatprep.subr.mxu0 0.0
  %126 = vmatpush1.msra.mxu0 0.0
  %127 = vmatprep.subr.mxu0 0.0
  %128 = vmatpush1.msra.mxu0 0.0
  %129 = vmatprep.subr.mxu0 0.0
  %130 = vmatpush1.msra.mxu0 0.0
  %131 = vmatprep.subr.mxu0 0.0
  %132 = vmatpush1.msra.mxu0 0.0
  %133 = vmatprep.subr.mxu0 0.0
  %134 = vmatpush1.msra.mxu0 0.0
  %135 = vmatprep.subr.mxu0 0.0
  %136 = vmatpush1.msra.mxu0 0.0
  %137 = vmatprep.subr.mxu0 0.0
  %138 = vmatpush1.msra.mxu0 0.0
  %139 = vmatprep.subr.mxu0 0.0
  %140 = vmatpush1.msra.mxu0 0.0
  %141 = vmatprep.subr.mxu0 0.0
  %142 = vmatpush1.msra.mxu0 0.0
  %143 = vmatprep.subr.mxu0 0.0
  %144 = vmatpush1.msra.mxu0 0.0
  %145 = vmatprep.subr.mxu0 0.0
  %146 = vmatpush1.msra.mxu0 0.0
  %147 = vmatprep.subr.mxu0 0.0
  %148 = vmatpush1.msra.mxu0 %v111
  %149 = vmatprep.subr.mxu0 0.0
  %150 = vmatpush1.msra.mxu0 %v110
  %151 = vmatprep.subr.mxu0 0.0
  %152 = vmatpush1.msra.mxu0 %v109
  %153 = vmatprep.subr.mxu0 0.0
  %154 = vmatpush1.msra.mxu0 %v108
  %155 = vmatprep.subr.mxu0 0.0
  %156 = vmatpush2.msra.mxu0 0.0
  %157 = vmatprep.subr.mxu0 0.0
  %158 = vmatpush2.msra.mxu0 0.0
  %159 = vmatprep.subr.mxu0 0.0
  %160 = vmatpush2.msra.mxu0 0.0
  %161 = vmatprep.subr.mxu0 0.0
  %162 = vmatpush2.msra.mxu0 0.0
  %163 = vmatprep.subr.mxu0 0.0
  %164 = vmatpush2.msra.mxu0 0.0
  %165 = vmatprep.subr.mxu0 0.0
  %166 = vmatpush2.msra.mxu0 0.0
  %167 = vmatprep.subr.mxu0 0.0
  %168 = vmatpush2.msra.mxu0 0.0
  %169 = vmatprep.subr.mxu0 0.0
  %170 = vmatpush2.msra.mxu0 0.0
  %171 = vmatprep.subr.mxu0 0.0
  %172 = vmatpush2.msra.mxu0 0.0
  %173 = vmatprep.subr.mxu0 0.0
  %174 = vmatpush2.msra.mxu0 0.0
  %175 = vmatprep.subr.mxu0 0.0
  %176 = vmatpush2.msra.mxu0 0.0
  %177 = vmatprep.subr.mxu0 0.0
  %178 = vmatpush2.msra.mxu0 0.0
  %179 = vmatprep.subr.mxu0 0.0
  %180 = vmatpush2.msra.mxu0 0.0
  %181 = vmatprep.subr.mxu0 0.0
  %182 = vmatpush2.msra.mxu0 0.0
  %183 = vmatprep.subr.mxu0 0.0
  %184 = vmatpush2.msra.mxu0 0.0
  %185 = vmatprep.subr.mxu0 0.0
  %186 = vmatpush2.msra.mxu0 0.0
  %187 = vmatprep.mubr.f32.mxu0 0.0
  %188 = vmatmul.mubr.f32.gmra.mxu0 %v121
  %v189 = vpop.f32.mrf.mxu0
  %v190 = vadd.f32 %v117, %v189
  %v191 = vpop.f32.mrf.mxu0
  %192 = vdwg.mxu0
  %vm193 = vcmask 23552
  %v194 = vsel %vm193, %v190, -inf
  %195 = vmax.xlane.f32.xlu0 %v194
  %v196 = vpop.xlane.xlu0 %195
  %v197 = vsub.f32 %v190, %v196
  %v198 = vmul.f32 %v197, 1.442695
  %v199 = vpow.pop %v198
  %v200 = vsel %vm193, %v199, 0.0
  %201 = vadd.xlane.f32.xlu0 %v200
  %v202 = vpop.xlane.xlu0 %201
  %v203 = vrcp.pop %v202
  %v204 = vmul.f32 %v199, %v203
  %205 = vst.msk [vmem:[%s5] sm:$0xff] %vm193, %v204
  // Predicated region
  $region22: #{policy_nn_forward.1} parent=0 // pred_check
    _
  $region23: #{policy_nn_forward.1} parent=0 // pred_check_branch
    %207 = sbr.rel (0) target = $region25
  $region24: #{policy_nn_forward.1} parent=0 // pred_region
    _
  $region25: #{policy_nn_forward.1} parent=0 // pred_fallthru
    _
  // Predicated region
  $region26: #{policy_nn_forward.1} parent=0 // pred_check
    _
  $region27: #{policy_nn_forward.1} parent=0 // pred_check_branch
    %209 = sbr.rel (0) target = $region29
  $region28: #{policy_nn_forward.1} parent=0 // pred_region
    _
  $region29: #{policy_nn_forward.1} parent=0 // pred_fallthru
    _

</llo_original>
